<compile_context>
chip_gen: v5e
topology: v5e:2x2
jax: 0.10.0
libtpu: 0.0.40
codegen_flags: <defaults>
</compile_context>

<pallas_src>
import functools

import jax
import jax.numpy as jnp
import numpy as np
from jax import lax
from jax.experimental import pallas as pl
from jax.experimental.pallas import tpu as pltpu

# ---- sizes implied by the module: fc_map expects 4356 = 4 * 33 * 33 -> maps are 33x33
STATE_FLOAT_DIM = 6            # state_dim[0]
MAP_CHANNELS = 3               # state_dim[1][0]
MAP_H = MAP_W = 33
ACTION_DIM = (2, 3)            # (move_or_not, rotate)
BATCH = 2

H_PAD = MAP_H + 2              # 35   zero-padded height
W_PAD = MAP_W + 2              # 35   zero-padded width
NPOS_RAW = H_PAD * W_PAD       # 1225
NPOS = 1280                    # per-image flat length padded to a multiple of 128
CIN_PAD = 8                    # conv1 input channels padded 3 -> 8 (sublane friendly)
HEAD_W = 128                   # lane-padded width of both action heads
NEG_PAD = -1e30                # bias for padded head lanes (softmax ignores them)


# --------------------------------------------------------------------------- kernel
def _fused_kernel(xf_ref, xm_ref, mask_ref,
                  wfl_ref, wc1_ref, wc2_ref, wfm_ref, wtail_ref,
                  bflm_ref, btail_ref, bc1_ref, bc2_ref,
                  outm_ref, outr_ref,
                  col1_ref, col2_ref,
                  *, B, roll_sign):
    f32, bf16 = jnp.float32, jnp.bfloat16
    N = B * NPOS
    offsets = tuple(dy * W_PAD + dx for dy in (-1, 0, 1) for dx in (-1, 0, 1))

    def shifted(x, off):            # x[:, q] -> x[:, q + off]  (lane rotation, XLU)
        if off == 0:
            return x
        return pltpu.roll(x, shift=(roll_sign * (-off)) % N, axis=1)

    mask = mask_ref[...]                                           # (1, N) f32

    # ---- float-feature branch: x1 = relu(xf @ Wfl^T + bfl) -------------- (B, 32)
    x1 = jnp.maximum(
        jnp.dot(xf_ref[...], wfl_ref[...], preferred_element_type=f32)
        + bflm_ref[:, 0:32], 0.0)

    # ---- conv1 (3x3, pad 1, Cin->8): im2col + single (8,72)@(72,N) matmul -------
    xm = xm_ref[...].astype(f32)                                   # (8, N); rows 3..7 = 0
    for t, off in enumerate(offsets):
        col1_ref[t * 8:(t + 1) * 8, :] = shifted(xm, off)
    acc1 = jnp.dot(wc1_ref[...], col1_ref[...], preferred_element_type=f32)
    y1 = jnp.maximum(acc1 + bc1_ref[...], 0.0) * mask              # (8, N) f32

    # ---- conv2 (3x3, pad 1, 8->4): im2col + single (4,72)@(72,N) matmul ---------
    for t, off in enumerate(offsets):
        col2_ref[t * 8:(t + 1) * 8, :] = shifted(y1, off)
    acc2 = jnp.dot(wc2_ref[...], col2_ref[...], preferred_element_type=f32)
    y2 = (jnp.maximum(acc2 + bc2_ref[...], 0.0) * mask).astype(bf16)   # (4, N)

    # ---- fc_map, batched per image against a channel-wide weight ----------------
    # wfm_ref is (NPOS, 4*32): column block c holds fc_map weights of conv channel c;
    # keep the per-channel "diagonal" blocks of the product and sum them.
    rowsel = lax.broadcasted_iota(jnp.int32, (B, 1), 0)
    x2 = jnp.zeros((B, 32), f32)
    for b in range(B):
        r = jnp.dot(y2[:, b * NPOS:(b + 1) * NPOS], wfm_ref[...],
                    preferred_element_type=f32)                    # (4, 128)
        xb = r[0:1, 0:32] + r[1:2, 32:64] + r[2:3, 64:96] + r[3:4, 96:128]
        x2 = x2 + jnp.where(rowsel == b, xb, 0.0)                  # place into row b
    x2 = jnp.maximum(x2 + bflm_ref[:, 32:64], 0.0)                 # (B, 32)

    # ---- fc_combined on concat([x1, x2]) expressed without an explicit concat ---
    wfc = wtail_ref[:, 2 * HEAD_W:2 * HEAD_W + 64]                 # (64, 64) bf16
    h = jnp.maximum(
        jnp.dot(x1.astype(bf16), wfc[0:32, :], preferred_element_type=f32)
        + jnp.dot(x2.astype(bf16), wfc[32:64, :], preferred_element_type=f32)
        + btail_ref[:, 2 * HEAD_W:2 * HEAD_W + 64], 0.0).astype(bf16)   # (B, 64)

    # ---- action heads, lane-padded to HEAD_W (pad bias = -1e30) -----------------
    lm = (jnp.dot(h, wtail_ref[:, 0:HEAD_W], preferred_element_type=f32)
          + btail_ref[:, 0:HEAD_W])
    lr = (jnp.dot(h, wtail_ref[:, HEAD_W:2 * HEAD_W], preferred_element_type=f32)
          + btail_ref[:, HEAD_W:2 * HEAD_W])

    outm_ref[...] = lm                                             # branch 1 (critic): raw values
    outr_ref[...] = lr

    @pl.when(pl.program_id(0) == 0)                                # branch 0 (actor): softmax
    def _():
        pm = jnp.exp(lm - jnp.max(lm, axis=1, keepdims=True))
        pr = jnp.exp(lr - jnp.max(lr, axis=1, keepdims=True))
        outm_ref[...] = pm / jnp.sum(pm, axis=1, keepdims=True)
        outr_ref[...] = pr / jnp.sum(pr, axis=1, keepdims=True)


# ------------------------------------------------------------------ roll convention
def _roll_probe_kernel(x_ref, o_ref):
    o_ref[...] = pltpu.roll(x_ref[...], shift=1, axis=1)


def _detect_roll_sign():
    """One-time probe of pltpu.roll's shift convention (guards either sign)."""
    x = jnp.arange(8 * 128, dtype=jnp.float32).reshape(8, 128)
    y = pl.pallas_call(_roll_probe_kernel,
                       out_shape=jax.ShapeDtypeStruct((8, 128), jnp.float32))(x)
    # jnp.roll convention: y[0, 1] == x[0, 0] == 0  -> use shift = -off
    return 1 if float(y[0, 1]) == 0.0 else -1


# --------------------------------------------------------------------------- wrapper
def _shared_spec(shape):
    nd = len(shape)
    return pl.BlockSpec(tuple(shape), lambda i: (0,) * nd)


def _stacked_spec(shape):
    nd = len(shape)
    return pl.BlockSpec((None,) + tuple(shape[1:]), lambda i: (i,) + (0,) * (nd - 1))


def actor_critic_forward(packed, xf, xmap, *, roll_sign):
    """Fused Actor + Critic forward (one pallas_call, grid = (actor, critic))."""
    B, cin = xmap.shape[0], xmap.shape[1]
    N = B * NPOS

    # Input layout glue: NCHW -> zero-pad spatial -> flatten -> pad to NPOS ->
    # pad channels to 8 -> concatenate the batch along the lane axis.
    xp = jnp.pad(xmap, ((0, 0), (0, 0), (1, 1), (1, 1)))           # (B, Cin, 35, 35)
    xp = xp.reshape(B, cin, NPOS_RAW)
    xp = jnp.pad(xp, ((0, 0), (0, CIN_PAD - cin), (0, NPOS - NPOS_RAW)))
    xflat = jnp.transpose(xp, (1, 0, 2)).reshape(CIN_PAD, N).astype(jnp.bfloat16)

    inputs = (xf.astype(jnp.float32), xflat, packed['mask'],
              packed['wfl'], packed['wc1'], packed['wc2'], packed['wfm'],
              packed['wtail'], packed['bflm'], packed['btail'],
              packed['bc1'], packed['bc2'])

    in_specs = ([_shared_spec(inputs[i].shape) for i in range(3)]
                + [_stacked_spec(p.shape) for p in inputs[3:]])
    out_shape = (jax.ShapeDtypeStruct((2, B, HEAD_W), jnp.float32),
                 jax.ShapeDtypeStruct((2, B, HEAD_W), jnp.float32))
    out_specs = (_stacked_spec((2, B, HEAD_W)), _stacked_spec((2, B, HEAD_W)))

    kern = functools.partial(_fused_kernel, B=B, roll_sign=roll_sign)
    outm, outr = pl.pallas_call(
        kern,
        grid=(2,),                                  # 0 = actor, 1 = critic
        in_specs=in_specs,
        out_specs=out_specs,
        out_shape=out_shape,
        scratch_shapes=[pltpu.VMEM((72, N), jnp.float32),   # conv1 im2col
                        pltpu.VMEM((72, N), jnp.float32)],  # conv2 im2col
        compiler_params=pltpu.CompilerParams(
            dimension_semantics=("parallel",)),     # 2 TCs on v7x; no-op on v5e/v6e
    )(*inputs)

    move_probs = outm[0, :, :ACTION_DIM[0]]
    rotate_probs = outr[0, :, :ACTION_DIM[1]]
    move_value = outm[1, :, :1]
    rotate_value = outr[1, :, :1]
    return move_probs, rotate_probs, move_value, rotate_value


# ---------------------------------------------------------- one-time weight packing
def _pack_branch(p, cin):
    f32, bf16 = jnp.float32, jnp.bfloat16

    wfl = p['wfl'].T.astype(f32)                                          # (S0, 32)

    wc1 = jnp.transpose(p['wc1'], (0, 2, 3, 1))                           # (8, 3, 3, cin)
    wc1 = jnp.pad(wc1, ((0, 0), (0, 0), (0, 0), (0, CIN_PAD - cin)))
    wc1 = wc1.reshape(8, 9 * CIN_PAD).astype(f32)                         # (8, 72)

    wc2 = jnp.transpose(p['wc2'], (0, 2, 3, 1)).reshape(4, 9 * 8).astype(f32)   # (4, 72)

    # fc_map: torch flatten order is (c, h, w); permute to the padded-flat layout and
    # widen so column block c holds channel c's weights -> (NPOS, 4*32).
    wfm = p['wfm'].T.reshape(4, MAP_H, MAP_W, 32)
    wfm = jnp.pad(wfm, ((0, 0), (1, 1), (1, 1), (0, 0)))
    wfm = wfm.reshape(4, NPOS_RAW, 32)
    wfm = jnp.pad(wfm, ((0, 0), (0, NPOS - NPOS_RAW), (0, 0)))
    wfm = jnp.transpose(wfm, (1, 0, 2)).reshape(NPOS, 4 * 32).astype(bf16)

    def head_w(w):        # (out, 64) -> (64, HEAD_W), zero padded columns
        wt = w.T
        return jnp.pad(wt, ((0, 0), (0, HEAD_W - wt.shape[1])))

    def head_b(b):        # (out,) -> (HEAD_W,), padded with NEG_PAD
        return jnp.pad(b, (0, HEAD_W - b.shape[0]), constant_values=NEG_PAD)

    wtail = jnp.concatenate(
        [head_w(p['wm']), head_w(p['wr']), p['wfc'].T], axis=1).astype(bf16)     # (64, 320)
    btail = jnp.concatenate(
        [head_b(p['bm']), head_b(p['br']), p['bfc']]).reshape(1, 2 * HEAD_W + 64).astype(f32)
    bflm = jnp.concatenate([p['bfl'], p['bfm']]).reshape(1, 64).astype(f32)

    return dict(wfl=wfl, wc1=wc1, wc2=wc2, wfm=wfm, wtail=wtail,
                btail=btail, bflm=bflm,
                bc1=p['bc1'].reshape(8, 1).astype(f32),
                bc2=p['bc2'].reshape(4, 1).astype(f32))


def pack_params(actor_p, critic_p, cin, batch):
    """One-time repack of both branches (stacked along a leading actor/critic axis)."""
    a = _pack_branch(actor_p, cin)
    c = _pack_branch(critic_p, cin)
    packed = {k: jnp.stack([a[k], c[k]], axis=0) for k in a}

    m = jnp.zeros((H_PAD, W_PAD), jnp.float32).at[1:1 + MAP_H, 1:1 + MAP_W].set(1.0)
    m = jnp.pad(m.reshape(-1), (0, NPOS - NPOS_RAW))
    packed['mask'] = jnp.tile(m, (batch,)).reshape(1, batch * NPOS)
    return packed


# --------------------------------------------------------------------------- params
def init_params(key, s0, cin, a0, a1):
    ks = jax.random.split(key, 14)

    def lin(k, out_f, in_f):
        return 0.3 * jax.random.normal(k, (out_f, in_f), jnp.float32) / jnp.sqrt(in_f)

    def vec(k, n):
        return 0.1 * jax.random.normal(k, (n,), jnp.float32)

    def conv(k, co, ci):
        return 0.3 * jax.random.normal(k, (co, ci, 3, 3), jnp.float32) / jnp.sqrt(ci * 9)

    return {
        'wfl': lin(ks[0], 32, s0),    'bfl': vec(ks[1], 32),
        'wc1': conv(ks[2], 8, cin),   'bc1': vec(ks[3], 8),
        'wc2': conv(ks[4], 4, 8),     'bc2': vec(ks[5], 4),
        'wfm': lin(ks[6], 32, 4 * MAP_H * MAP_W),  'bfm': vec(ks[7], 32),
        'wfc': lin(ks[8], 64, 64),    'bfc': vec(ks[9], 64),
        'wm':  lin(ks[10], a0, 64),   'bm':  vec(ks[11], a0),
        'wr':  lin(ks[12], a1, 64),   'br':  vec(ks[13], a1),
    }


# --------------------------------------------------------------------------- reference
def reference_branch(p, xf, xmap, apply_softmax):
    hi = lax.Precision.HIGHEST
    x1 = jax.nn.relu(jnp.dot(xf, p['wfl'].T, precision=hi) + p['bfl'])
    y = lax.conv_general_dilated(xmap, p['wc1'], (1, 1), ((1, 1), (1, 1)),
                                 dimension_numbers=('NCHW', 'OIHW', 'NCHW'), precision=hi)
    y = jax.nn.relu(y + p['bc1'][None, :, None, None])
    y = lax.conv_general_dilated(y, p['wc2'], (1, 1), ((1, 1), (1, 1)),
                                 dimension_numbers=('NCHW', 'OIHW', 'NCHW'), precision=hi)
    y = jax.nn.relu(y + p['bc2'][None, :, None, None])
    flat = y.reshape(y.shape[0], -1)                 # NCHW flatten, like torch .view
    x2 = jax.nn.relu(jnp.dot(flat, p['wfm'].T, precision=hi) + p['bfm'])
    x = jnp.concatenate([x1, x2], axis=1)
    x = jax.nn.relu(jnp.dot(x, p['wfc'].T, precision=hi) + p['bfc'])
    lm = jnp.dot(x, p['wm'].T, precision=hi) + p['bm']
    lr = jnp.dot(x, p['wr'].T, precision=hi) + p['br']
    if apply_softmax:
        lm = jax.nn.softmax(lm, axis=1)
        lr = jax.nn.softmax(lr, axis=1)
    return lm, lr


# --------------------------------------------------------------------------- main
if __name__ == "__main__":
    key = jax.random.PRNGKey(0)
    k_xf, k_xm, k_actor, k_critic = jax.random.split(key, 4)

    # state = (float features, occupancy map NCHW)
    xf = jax.random.normal(k_xf, (BATCH, STATE_FLOAT_DIM), jnp.float32)
    xmap = jax.random.normal(k_xm, (BATCH, MAP_CHANNELS, MAP_H, MAP_W), jnp.float32)

    actor_params = init_params(k_actor, STATE_FLOAT_DIM, MAP_CHANNELS,
                               ACTION_DIM[0], ACTION_DIM[1])
    critic_params = init_params(k_critic, STATE_FLOAT_DIM, MAP_CHANNELS, 1, 1)

    roll_sign = _detect_roll_sign()                               # one-time probe
    packed = pack_params(actor_params, critic_params, MAP_CHANNELS, BATCH)  # one-time repack

    fwd = jax.jit(functools.partial(actor_critic_forward, roll_sign=roll_sign))
    move_probs, rotate_probs, move_val, rotate_val = fwd(packed, xf, xmap)
    jax.block_until_ready((move_probs, rotate_probs, move_val, rotate_val))

    # correctness check vs a plain-JAX transcription of the PyTorch forward
    ref_mp, ref_rp = reference_branch(actor_params, xf, xmap, True)
    ref_mv, ref_rv = reference_branch(critic_params, xf, xmap, False)
    np.testing.assert_allclose(np.asarray(move_probs), np.asarray(ref_mp), rtol=1e-2, atol=2e-3)
    np.testing.assert_allclose(np.asarray(rotate_probs), np.asarray(ref_rp), rtol=1e-2, atol=2e-3)
    np.testing.assert_allclose(np.asarray(move_val), np.asarray(ref_mv), rtol=1e-2, atol=2e-3)
    np.testing.assert_allclose(np.asarray(rotate_val), np.asarray(ref_rv), rtol=1e-2, atol=2e-3)

    print("KERNEL_OK")
</pallas_src>

<mosaic_0001>
module attributes {stable_mosaic.version = 11 : i64} {
  func.func @_roll_probe_kernel(%arg0: memref<8x128xf32, #tpu.memory_space<vmem>>, %arg1: memref<8x128xf32, #tpu.memory_space<vmem>>) attributes {dimension_semantics = [], scalar_prefetch = 0 : i64, scratch_operands = 0 : i64, tpu.core_type = #tpu.core_type<tc>} {
    %c0 = arith.constant 0 : index
    %c0_0 = arith.constant 0 : index
    %0 = vector.load %arg0[%c0, %c0_0] : memref<8x128xf32, #tpu.memory_space<vmem>>, vector<8x128xf32>
    %c1_i32 = arith.constant 1 : i32
    %1 = tpu.dynamic_rotate %0 by %c1_i32 dim 1 : vector<8x128xf32>, i32 -> vector<8x128xf32>
    %c0_1 = arith.constant 0 : index
    %c0_2 = arith.constant 0 : index
    %2 = vector.load %arg1[%c0_1, %c0_2] : memref<8x128xf32, #tpu.memory_space<vmem>>, vector<8x128xf32>
    tpu.vector_store %arg1[%c0_1, %c0_2], %1 {strides = array<i32>} : memref<8x128xf32, #tpu.memory_space<vmem>>, vector<8x128xf32>,
    return
  }
}

</mosaic_0001>

<llo_original>
// kernel: tpu_custom_call.1
$region0: #{tpu_custom_call.1}
  #allocation0 [shape = 'u32[]', space=smem, size = 0x4, offset = 0x4, fixed_abs, tag = 'smem constant byte address 0x4 - core index']
  #allocation1 [shape = 'u32[72,128]{1,0:T(1,128)}', space=vmem, size = 0x9000, scoped, tag = 'internal scratch']
  %s0 = inlined_call_operand.hbm [shape: f32[8,128], index: 0, kind: input, shape index: {}]
  %s1 = inlined_call_operand.hbm [shape: f32[8,128], index: 1, kind: output, shape index: {}]
  %s2 = sld [smem:[#allocation0]]
  $region18: #{tpu_custom_call.1} parent=0
    _
  %s4 = ssub.s32 1, %s2
  %s5 = scalar_select 0, %s4, %s2
  $region1: #{tpu_custom_call.1} parent=0
    #allocation2 [shape = 'u8[4096]{0}', space=vmem, size = 0x1000, scoped, tag = 'input window, operand 0, single buffered']
    #allocation3 [shape = 's32[1]{0}', space=sflag, size = 0x4, scoped, tag = 'scoped memory for tpu_custom_call.1']
    #allocation4 [shape = 's32[1]{0}', space=sflag, size = 0x4, scoped, tag = 'scoped memory for tpu_custom_call.1']
    #allocation5 [shape = 'u8[4096]{0}', space=vmem, size = 0x1000, scoped, tag = 'output window, operand 0, single buffered']
    %6 = vsyncpa [#allocation3], 0
    %7 = vsyncpa [#allocation4], 0
    // Predicated region
    $region2: #{tpu_custom_call.1} parent=1 // pred_check
      _
    $region3: #{tpu_custom_call.1} parent=1 // pred_check_branch
      %9 = sbr.rel (0) target = $region5
    $region4: #{tpu_custom_call.1} parent=1 // pred_region
      %11 = vsyncadd [#allocation3], 0
      %s13 = sshll.u32 %s0, 4
      %s14 = int_to_ptr.hbm [resolvable:$true] %s13
      %s15 = sshll.u32 [#allocation2], 4
      %s16 = int_to_ptr.vmem [resolvable:$true] %s15
      %18 = dma.hbm_to_vmem [thread:$0]  %s14, 128, %s16, [#allocation3]
    $region5: #{tpu_custom_call.1} parent=1 // pred_fallthru
      _
    // Predicated region
    $region6: #{tpu_custom_call.1} parent=1 // pred_check
      _
    $region7: #{tpu_custom_call.1} parent=1 // pred_check_branch
      %20 = sbr.rel (0) target = $region9
    $region8: #{tpu_custom_call.1} parent=1 // pred_region
      %22 = dma.done [#allocation3], 128
    $region9: #{tpu_custom_call.1} parent=1 // pred_fallthru
      _
    %v23 = vld [vmem:[#allocation2] sm:$0xff]
    %24 = vrot.lane.b32.xlu0 %v23, 1
    %v25 = vpop.permute.xlu0 %24
    %26 = vst [vmem:[#allocation5] sm:$0xff] %v25
    // Predicated region
    $region10: #{tpu_custom_call.1} parent=1 // pred_check
      _
    $region11: #{tpu_custom_call.1} parent=1 // pred_check_branch
      %28 = sbr.rel (0) target = $region13
    $region12: #{tpu_custom_call.1} parent=1 // pred_region
      %30 = vsyncadd [#allocation4], 0
      %s32 = sshll.u32 [#allocation5], 4
      %s33 = int_to_ptr.vmem [resolvable:$true] %s32
      %s34 = sshll.u32 %s1, 4
      %s35 = int_to_ptr.hbm [resolvable:$true] %s34
      %37 = dma.vmem_to_hbm [thread:$0]  %s33, 128, %s35, [#allocation4]
    $region13: #{tpu_custom_call.1} parent=1 // pred_fallthru
      _
    // Predicated region
    $region14: #{tpu_custom_call.1} parent=1 // pred_check
      _
    $region15: #{tpu_custom_call.1} parent=1 // pred_check_branch
      %39 = sbr.rel (0) target = $region17
    $region16: #{tpu_custom_call.1} parent=1 // pred_region
      %41 = dma.done [#allocation4], 128
    $region17: #{tpu_custom_call.1} parent=1 // pred_fallthru
      _
    %42 = vsyncpa [#allocation3], 1
    %43 = vsyncpa [#allocation4], 1

</llo_original>
